<compile_context>
chip_gen: v6e
topology: v6e:2x2x1
jax: 0.10.0
libtpu: 0.0.40
codegen_flags: <defaults>
</compile_context>

<pallas_src>
import functools

import jax
import jax.numpy as jnp
from jax import lax
from jax.experimental import pallas as pl
from jax.experimental.pallas import tpu as pltpu


# --------------------------------------------------------------------------
# Kernel
# --------------------------------------------------------------------------
def _temporal_block_kernel(x_ref, w1_ref, b1_ref, w2_ref, b2_ref, *rest,
                           kernel_size, dilation, pad, has_downsample):
    if has_downsample:
        wd_ref, bd_ref, o_ref, xp_ref, h1p_ref = rest
    else:
        o_ref, xp_ref, h1p_ref = rest

    l_out = o_ref.shape[-1]           # = L (chomp fused away)
    c_out = o_ref.shape[1]
    x32 = x_ref[0].astype(jnp.float32)                     # (C_in, L)

    # ---- causal left-padding of the input (this IS chomp1, fused) ----------
    xp_ref[...] = jnp.zeros(xp_ref.shape, jnp.float32)
    xp_ref[:, pad:] = x32

    # ---- conv1: dilated causal conv = K shifted-window MXU matmuls ---------
    acc = jnp.zeros((c_out, l_out), jnp.float32)
    for j in range(kernel_size):                            # static unroll
        off = j * dilation
        acc = acc + jnp.dot(w1_ref[j].astype(jnp.float32),
                            xp_ref[:, off:off + l_out],
                            preferred_element_type=jnp.float32)
    h1 = jnp.maximum(acc + b1_ref[...], 0.0)                # relu1
    # TODO(synk): dropout1/dropout2 are identity (inference mode); training-mode
    # dropout would use pltpu.prng_seed + pltpu.prng_random_bits masking.

    # ---- conv2 on the left-padded hidden activation (chomp2 fused) ---------
    h1p_ref[...] = jnp.zeros(h1p_ref.shape, jnp.float32)
    h1p_ref[:, pad:] = h1
    acc2 = jnp.zeros((c_out, l_out), jnp.float32)
    for j in range(kernel_size):
        off = j * dilation
        acc2 = acc2 + jnp.dot(w2_ref[j].astype(jnp.float32),
                              h1p_ref[:, off:off + l_out],
                              preferred_element_type=jnp.float32)
    h2 = jnp.maximum(acc2 + b2_ref[...], 0.0)               # relu2

    # ---- residual (1x1-conv downsample when C_in != C_out) + final relu ----
    if has_downsample:
        res = jnp.dot(wd_ref[...].astype(jnp.float32), x32,
                      preferred_element_type=jnp.float32) + bd_ref[...]
    else:
        res = x32
    o_ref[0] = jnp.maximum(h2 + res, 0.0).astype(o_ref.dtype)


# --------------------------------------------------------------------------
# Wrapper
# --------------------------------------------------------------------------
def temporal_block_forward(x, w1, b1, w2, b2, w_down=None, b_down=None, *,
                           kernel_size, stride, dilation, padding):
    """Fused TemporalBlock forward.  Weights are the *effective* (already
    weight-normalized) Conv1d weights in PyTorch layout (C_out, C_in, K)."""
    assert stride == 1, "TemporalBlock residual requires stride == 1"
    assert padding == dilation * (kernel_size - 1), \
        "conv+chomp only keeps lengths equal when padding == dilation*(K-1)"

    n, c_in, l = x.shape
    c_out = w1.shape[0]
    has_downsample = w_down is not None

    # tap-major weights: (K, C_out, C_in) so each tap is one MXU matmul LHS.
    w1_t = jnp.transpose(w1, (2, 0, 1))
    w2_t = jnp.transpose(w2, (2, 0, 1))
    b1_c = b1.reshape(c_out, 1)
    b2_c = b2.reshape(c_out, 1)

    kernel = functools.partial(
        _temporal_block_kernel,
        kernel_size=kernel_size, dilation=dilation, pad=padding,
        has_downsample=has_downsample)

    in_specs = [
        pl.BlockSpec((1, c_in, l), lambda b: (b, 0, 0)),                 # x
        pl.BlockSpec((kernel_size, c_out, c_in), lambda b: (0, 0, 0)),   # w1
        pl.BlockSpec((c_out, 1), lambda b: (0, 0)),                      # b1
        pl.BlockSpec((kernel_size, c_out, c_out), lambda b: (0, 0, 0)),  # w2
        pl.BlockSpec((c_out, 1), lambda b: (0, 0)),                      # b2
    ]
    args = [x, w1_t, b1_c, w2_t, b2_c]
    if has_downsample:
        in_specs += [pl.BlockSpec((c_out, c_in), lambda b: (0, 0)),      # wd
                     pl.BlockSpec((c_out, 1), lambda b: (0, 0))]         # bd
        args += [w_down.reshape(c_out, c_in), b_down.reshape(c_out, 1)]

    return pl.pallas_call(
        kernel,
        out_shape=jax.ShapeDtypeStruct((n, c_out, l), x.dtype),
        grid_spec=pltpu.PrefetchScalarGridSpec(
            num_scalar_prefetch=0,
            grid=(n,),
            in_specs=in_specs,
            out_specs=pl.BlockSpec((1, c_out, l), lambda b: (b, 0, 0)),
            scratch_shapes=[
                pltpu.VMEM((c_in, l + padding), jnp.float32),    # padded x
                pltpu.VMEM((c_out, l + padding), jnp.float32),   # padded h1
            ]),
        compiler_params=pltpu.CompilerParams(
            dimension_semantics=("parallel",),
        ),
    )(*args)


# --------------------------------------------------------------------------
# Parameter helpers + pure-JAX reference
# --------------------------------------------------------------------------
def weight_norm_weight(v, g):
    """PyTorch nn.utils.weight_norm (dim=0): w = g * v / ||v||_(per out-chan)."""
    norm = jnp.sqrt(jnp.sum(v * v, axis=(1, 2), keepdims=True))
    return g * v / norm


def _reference_forward(x, w1, b1, w2, b2, w_down, b_down, *, padding, dilation):
    def conv(h, w, b):
        y = lax.conv_general_dilated(
            h, w, window_strides=(1,), padding=[(padding, padding)],
            rhs_dilation=(dilation,),
            dimension_numbers=("NCH", "OIH", "NCH"),
            precision=lax.Precision.HIGHEST)
        return y + b[None, :, None]

    out = conv(x, w1, b1)[:, :, :-padding]          # conv1 + chomp1
    out = jnp.maximum(out, 0.0)                     # relu1 (dropout = identity)
    out = conv(out, w2, b2)[:, :, :-padding]        # conv2 + chomp2
    out = jnp.maximum(out, 0.0)                     # relu2 (dropout = identity)
    if w_down is None:
        res = x
    else:
        res = jnp.einsum("oc,ncl->nol", w_down.reshape(w_down.shape[0], -1), x,
                         precision=lax.Precision.HIGHEST) + b_down[None, :, None]
    return jnp.maximum(out + res, 0.0)


# --------------------------------------------------------------------------
# Demo / self-check
# --------------------------------------------------------------------------
if __name__ == "__main__":
    N, C_IN, C_OUT, L = 2, 4, 8, 16
    K, STRIDE, DILATION = 3, 1, 2
    PADDING = (K - 1) * DILATION        # standard TCN: output length == L
    DROPOUT = 0.2                       # identity at inference

    key = jax.random.PRNGKey(0)
    ks = jax.random.split(key, 9)
    x = jax.random.normal(ks[0], (N, C_IN, L), dtype=jnp.float32)

    # weight_norm parameters (v, g) + biases for both convs, plus 1x1 downsample.
    v1 = 0.01 * jax.random.normal(ks[1], (C_OUT, C_IN, K), jnp.float32)
    g1 = 1.0 + 0.1 * jax.random.normal(ks[2], (C_OUT, 1, 1), jnp.float32)
    b1 = 0.01 * jax.random.normal(ks[3], (C_OUT,), jnp.float32)
    v2 = 0.01 * jax.random.normal(ks[4], (C_OUT, C_OUT, K), jnp.float32)
    g2 = 1.0 + 0.1 * jax.random.normal(ks[5], (C_OUT, 1, 1), jnp.float32)
    b2 = 0.01 * jax.random.normal(ks[6], (C_OUT,), jnp.float32)
    w_down = 0.01 * jax.random.normal(ks[7], (C_OUT, C_IN, 1), jnp.float32)
    b_down = 0.01 * jax.random.normal(ks[8], (C_OUT,), jnp.float32)

    w1 = weight_norm_weight(v1, g1)     # effective conv1 weight
    w2 = weight_norm_weight(v2, g2)     # effective conv2 weight

    out = temporal_block_forward(
        x, w1, b1, w2, b2, w_down, b_down,
        kernel_size=K, stride=STRIDE, dilation=DILATION, padding=PADDING)
    out = jax.block_until_ready(out)

    ref = _reference_forward(x, w1, b1, w2, b2, w_down, b_down,
                             padding=PADDING, dilation=DILATION)

    assert out.shape == (N, C_OUT, L), out.shape
    assert out.dtype == x.dtype
    assert jnp.allclose(out, ref, rtol=1e-3, atol=1e-3), \
        f"mismatch: max abs err {float(jnp.max(jnp.abs(out - ref)))}"

    print("KERNEL_OK")
</pallas_src>

<mosaic_0001>
module attributes {stable_mosaic.version = 11 : i64} {
  func.func @_temporal_block_kernel(%arg0: i32, %arg1: memref<1x4x16xf32, #tpu.memory_space<vmem>>, %arg2: memref<3x8x4xf32, #tpu.memory_space<vmem>>, %arg3: memref<8x1xf32, #tpu.memory_space<vmem>>, %arg4: memref<3x8x8xf32, #tpu.memory_space<vmem>>, %arg5: memref<8x1xf32, #tpu.memory_space<vmem>>, %arg6: memref<8x4xf32, #tpu.memory_space<vmem>>, %arg7: memref<8x1xf32, #tpu.memory_space<vmem>>, %arg8: memref<1x8x16xf32, #tpu.memory_space<vmem>>, %arg9: memref<4x20xf32, #tpu.memory_space<vmem>>, %arg10: memref<8x20xf32, #tpu.memory_space<vmem>>) attributes {dimension_semantics = [#tpu.dimension_semantics<parallel>], iteration_bounds = array<i64: 2>, scalar_prefetch = 0 : i64, scratch_operands = 2 : i64, tpu.core_type = #tpu.core_type<tc>, window_params = [{transform_indices = @transform_0, window_bounds = array<i64: 1, 4, 16>}, {pipeline_mode = #tpu.pipeline_mode<synchronous>, transform_indices = @transform_1, window_bounds = array<i64: 3, 8, 4>}, {pipeline_mode = #tpu.pipeline_mode<synchronous>, transform_indices = @transform_2, window_bounds = array<i64: 8, 1>}, {pipeline_mode = #tpu.pipeline_mode<synchronous>, transform_indices = @transform_3, window_bounds = array<i64: 3, 8, 8>}, {pipeline_mode = #tpu.pipeline_mode<synchronous>, transform_indices = @transform_4, window_bounds = array<i64: 8, 1>}, {pipeline_mode = #tpu.pipeline_mode<synchronous>, transform_indices = @transform_5, window_bounds = array<i64: 8, 4>}, {pipeline_mode = #tpu.pipeline_mode<synchronous>, transform_indices = @transform_6, window_bounds = array<i64: 8, 1>}, {transform_indices = @transform_7, window_bounds = array<i64: 1, 8, 16>}]} {
    %c0 = arith.constant 0 : index
    %c0_0 = arith.constant 0 : index
    %c0_1 = arith.constant 0 : index
    %0 = vector.load %arg1[%c0, %c0_0, %c0_1] : memref<1x4x16xf32, #tpu.memory_space<vmem>>, vector<1x4x16xf32>
    %1 = vector.shape_cast %0 : vector<1x4x16xf32> to vector<4x16xf32>
    %cst = arith.constant 0.000000e+00 : f32
    %2 = vector.broadcast %cst : f32 to vector<4x20xf32>
    %c0_2 = arith.constant 0 : index
    %c0_3 = arith.constant 0 : index
    %3 = vector.load %arg9[%c0_2, %c0_3] : memref<4x20xf32, #tpu.memory_space<vmem>>, vector<4x20xf32>
    tpu.vector_store %arg9[%c0_2, %c0_3], %2 {strides = array<i32>} : memref<4x20xf32, #tpu.memory_space<vmem>>, vector<4x20xf32>,
    %c0_4 = arith.constant 0 : index
    %c4 = arith.constant 4 : index
    %4 = vector.load %arg9[%c0_4, %c4] : memref<4x20xf32, #tpu.memory_space<vmem>>, vector<4x16xf32>
    tpu.vector_store %arg9[%c0_4, %c4], %1 {strides = array<i32>} : memref<4x20xf32, #tpu.memory_space<vmem>>, vector<4x16xf32>,
    %cst_5 = arith.constant 0.000000e+00 : f32
    %5 = vector.broadcast %cst_5 : f32 to vector<8x16xf32>
    %c0_6 = arith.constant 0 : index
    %c0_7 = arith.constant 0 : index
    %c0_8 = arith.constant 0 : index
    %6 = vector.load %arg2[%c0_6, %c0_7, %c0_8] : memref<3x8x4xf32, #tpu.memory_space<vmem>>, vector<1x8x4xf32>
    %7 = vector.shape_cast %6 : vector<1x8x4xf32> to vector<8x4xf32>
    %c0_9 = arith.constant 0 : index
    %c0_10 = arith.constant 0 : index
    %8 = vector.load %arg9[%c0_9, %c0_10] : memref<4x20xf32, #tpu.memory_space<vmem>>, vector<4x16xf32>
    %cst_11 = arith.constant dense<0.000000e+00> : vector<8x16xf32>
    %9 = tpu.matmul %7, %8, %cst_11 {dimension_numbers = #tpu.dot_dimension_numbers<[1], [0], [0], [1], [0, 0, 1, 1], [], []>} : vector<8x4xf32>, vector<4x16xf32>, vector<8x16xf32> -> vector<8x16xf32>
    %10 = arith.addf %5, %9 : vector<8x16xf32>
    %c1 = arith.constant 1 : index
    %c0_12 = arith.constant 0 : index
    %c0_13 = arith.constant 0 : index
    %11 = vector.load %arg2[%c1, %c0_12, %c0_13] : memref<3x8x4xf32, #tpu.memory_space<vmem>>, vector<1x8x4xf32>
    %12 = vector.shape_cast %11 : vector<1x8x4xf32> to vector<8x4xf32>
    %c0_14 = arith.constant 0 : index
    %c2 = arith.constant 2 : index
    %13 = vector.load %arg9[%c0_14, %c2] : memref<4x20xf32, #tpu.memory_space<vmem>>, vector<4x16xf32>
    %cst_15 = arith.constant dense<0.000000e+00> : vector<8x16xf32>
    %14 = tpu.matmul %12, %13, %cst_15 {dimension_numbers = #tpu.dot_dimension_numbers<[1], [0], [0], [1], [0, 0, 1, 1], [], []>} : vector<8x4xf32>, vector<4x16xf32>, vector<8x16xf32> -> vector<8x16xf32>
    %15 = arith.addf %10, %14 : vector<8x16xf32>
    %c2_16 = arith.constant 2 : index
    %c0_17 = arith.constant 0 : index
    %c0_18 = arith.constant 0 : index
    %16 = vector.load %arg2[%c2_16, %c0_17, %c0_18] : memref<3x8x4xf32, #tpu.memory_space<vmem>>, vector<1x8x4xf32>
    %17 = vector.shape_cast %16 : vector<1x8x4xf32> to vector<8x4xf32>
    %c0_19 = arith.constant 0 : index
    %c4_20 = arith.constant 4 : index
    %18 = vector.load %arg9[%c0_19, %c4_20] : memref<4x20xf32, #tpu.memory_space<vmem>>, vector<4x16xf32>
    %cst_21 = arith.constant dense<0.000000e+00> : vector<8x16xf32>
    %19 = tpu.matmul %17, %18, %cst_21 {dimension_numbers = #tpu.dot_dimension_numbers<[1], [0], [0], [1], [0, 0, 1, 1], [], []>} : vector<8x4xf32>, vector<4x16xf32>, vector<8x16xf32> -> vector<8x16xf32>
    %20 = arith.addf %15, %19 : vector<8x16xf32>
    %c0_22 = arith.constant 0 : index
    %c0_23 = arith.constant 0 : index
    %21 = vector.load %arg3[%c0_22, %c0_23] : memref<8x1xf32, #tpu.memory_space<vmem>>, vector<8x1xf32>
    %22 = vector.broadcast %21 : vector<8x1xf32> to vector<8x16xf32>
    %23 = arith.addf %20, %22 : vector<8x16xf32>
    %cst_24 = arith.constant 0.000000e+00 : f32
    %24 = vector.broadcast %cst_24 : f32 to vector<8x16xf32>
    %25 = arith.maximumf %23, %24 : vector<8x16xf32>
    %cst_25 = arith.constant 0.000000e+00 : f32
    %26 = vector.broadcast %cst_25 : f32 to vector<8x20xf32>
    %c0_26 = arith.constant 0 : index
    %c0_27 = arith.constant 0 : index
    %27 = vector.load %arg10[%c0_26, %c0_27] : memref<8x20xf32, #tpu.memory_space<vmem>>, vector<8x20xf32>
    tpu.vector_store %arg10[%c0_26, %c0_27], %26 {strides = array<i32>} : memref<8x20xf32, #tpu.memory_space<vmem>>, vector<8x20xf32>,
    %c0_28 = arith.constant 0 : index
    %c4_29 = arith.constant 4 : index
    %28 = vector.load %arg10[%c0_28, %c4_29] : memref<8x20xf32, #tpu.memory_space<vmem>>, vector<8x16xf32>
    tpu.vector_store %arg10[%c0_28, %c4_29], %25 {strides = array<i32>} : memref<8x20xf32, #tpu.memory_space<vmem>>, vector<8x16xf32>,
    %cst_30 = arith.constant 0.000000e+00 : f32
    %29 = vector.broadcast %cst_30 : f32 to vector<8x16xf32>
    %c0_31 = arith.constant 0 : index
    %c0_32 = arith.constant 0 : index
    %c0_33 = arith.constant 0 : index
    %30 = vector.load %arg4[%c0_31, %c0_32, %c0_33] : memref<3x8x8xf32, #tpu.memory_space<vmem>>, vector<1x8x8xf32>
    %31 = vector.shape_cast %30 : vector<1x8x8xf32> to vector<8x8xf32>
    %c0_34 = arith.constant 0 : index
    %c0_35 = arith.constant 0 : index
    %32 = vector.load %arg10[%c0_34, %c0_35] : memref<8x20xf32, #tpu.memory_space<vmem>>, vector<8x16xf32>
    %cst_36 = arith.constant dense<0.000000e+00> : vector<8x16xf32>
    %33 = tpu.matmul %31, %32, %cst_36 {dimension_numbers = #tpu.dot_dimension_numbers<[1], [0], [0], [1], [0, 0, 1, 1], [], []>} : vector<8x8xf32>, vector<8x16xf32>, vector<8x16xf32> -> vector<8x16xf32>
    %34 = arith.addf %29, %33 : vector<8x16xf32>
    %c1_37 = arith.constant 1 : index
    %c0_38 = arith.constant 0 : index
    %c0_39 = arith.constant 0 : index
    %35 = vector.load %arg4[%c1_37, %c0_38, %c0_39] : memref<3x8x8xf32, #tpu.memory_space<vmem>>, vector<1x8x8xf32>
    %36 = vector.shape_cast %35 : vector<1x8x8xf32> to vector<8x8xf32>
    %c0_40 = arith.constant 0 : index
    %c2_41 = arith.constant 2 : index
    %37 = vector.load %arg10[%c0_40, %c2_41] : memref<8x20xf32, #tpu.memory_space<vmem>>, vector<8x16xf32>
    %cst_42 = arith.constant dense<0.000000e+00> : vector<8x16xf32>
    %38 = tpu.matmul %36, %37, %cst_42 {dimension_numbers = #tpu.dot_dimension_numbers<[1], [0], [0], [1], [0, 0, 1, 1], [], []>} : vector<8x8xf32>, vector<8x16xf32>, vector<8x16xf32> -> vector<8x16xf32>
    %39 = arith.addf %34, %38 : vector<8x16xf32>
    %c2_43 = arith.constant 2 : index
    %c0_44 = arith.constant 0 : index
    %c0_45 = arith.constant 0 : index
    %40 = vector.load %arg4[%c2_43, %c0_44, %c0_45] : memref<3x8x8xf32, #tpu.memory_space<vmem>>, vector<1x8x8xf32>
    %41 = vector.shape_cast %40 : vector<1x8x8xf32> to vector<8x8xf32>
    %c0_46 = arith.constant 0 : index
    %c4_47 = arith.constant 4 : index
    %42 = vector.load %arg10[%c0_46, %c4_47] : memref<8x20xf32, #tpu.memory_space<vmem>>, vector<8x16xf32>
    %cst_48 = arith.constant dense<0.000000e+00> : vector<8x16xf32>
    %43 = tpu.matmul %41, %42, %cst_48 {dimension_numbers = #tpu.dot_dimension_numbers<[1], [0], [0], [1], [0, 0, 1, 1], [], []>} : vector<8x8xf32>, vector<8x16xf32>, vector<8x16xf32> -> vector<8x16xf32>
    %44 = arith.addf %39, %43 : vector<8x16xf32>
    %c0_49 = arith.constant 0 : index
    %c0_50 = arith.constant 0 : index
    %45 = vector.load %arg5[%c0_49, %c0_50] : memref<8x1xf32, #tpu.memory_space<vmem>>, vector<8x1xf32>
    %46 = vector.broadcast %45 : vector<8x1xf32> to vector<8x16xf32>
    %47 = arith.addf %44, %46 : vector<8x16xf32>
    %cst_51 = arith.constant 0.000000e+00 : f32
    %48 = vector.broadcast %cst_51 : f32 to vector<8x16xf32>
    %49 = arith.maximumf %47, %48 : vector<8x16xf32>
    %c0_52 = arith.constant 0 : index
    %c0_53 = arith.constant 0 : index
    %50 = vector.load %arg6[%c0_52, %c0_53] : memref<8x4xf32, #tpu.memory_space<vmem>>, vector<8x4xf32>
    %cst_54 = arith.constant dense<0.000000e+00> : vector<8x16xf32>
    %51 = tpu.matmul %50, %1, %cst_54 {dimension_numbers = #tpu.dot_dimension_numbers<[1], [0], [0], [1], [0, 0, 1, 1], [], []>} : vector<8x4xf32>, vector<4x16xf32>, vector<8x16xf32> -> vector<8x16xf32>
    %c0_55 = arith.constant 0 : index
    %c0_56 = arith.constant 0 : index
    %52 = vector.load %arg7[%c0_55, %c0_56] : memref<8x1xf32, #tpu.memory_space<vmem>>, vector<8x1xf32>
    %53 = vector.broadcast %52 : vector<8x1xf32> to vector<8x16xf32>
    %54 = arith.addf %51, %53 : vector<8x16xf32>
    %55 = arith.addf %49, %54 : vector<8x16xf32>
    %cst_57 = arith.constant 0.000000e+00 : f32
    %56 = vector.broadcast %cst_57 : f32 to vector<8x16xf32>
    %57 = arith.maximumf %55, %56 : vector<8x16xf32>
    %c0_58 = arith.constant 0 : index
    %c0_59 = arith.constant 0 : index
    %c0_60 = arith.constant 0 : index
    %58 = vector.load %arg8[%c0_58, %c0_59, %c0_60] : memref<1x8x16xf32, #tpu.memory_space<vmem>>, vector<1x8x16xf32>
    %59 = vector.shape_cast %58 : vector<1x8x16xf32> to vector<8x16xf32>
    %60 = vector.shape_cast %57 : vector<8x16xf32> to vector<1x8x16xf32>
    tpu.vector_store %arg8[%c0_58, %c0_59, %c0_60], %60 {strides = array<i32>} : memref<1x8x16xf32, #tpu.memory_space<vmem>>, vector<1x8x16xf32>,
    return
  }
  func.func @transform_0(%arg0: i32) -> (i32, i32, i32) {
    %c0_i32 = arith.constant 0 : i32
    %c0_i32_0 = arith.constant 0 : i32
    %c0_i32_1 = arith.constant 0 : i32
    return %arg0, %c0_i32, %c0_i32_0 : i32, i32, i32
  }
  func.func @transform_1(%arg0: i32) -> (i32, i32, i32) {
    %c0_i32 = arith.constant 0 : i32
    %c0_i32_0 = arith.constant 0 : i32
    %c0_i32_1 = arith.constant 0 : i32
    %c0_i32_2 = arith.constant 0 : i32
    return %c0_i32, %c0_i32_0, %c0_i32_1 : i32, i32, i32
  }
  func.func @transform_2(%arg0: i32) -> (i32, i32) {
    %c0_i32 = arith.constant 0 : i32
    %c0_i32_0 = arith.constant 0 : i32
    %c0_i32_1 = arith.constant 0 : i32
    return %c0_i32, %c0_i32_0 : i32, i32
  }
  func.func @transform_3(%arg0: i32) -> (i32, i32, i32) {
    %c0_i32 = arith.constant 0 : i32
    %c0_i32_0 = arith.constant 0 : i32
    %c0_i32_1 = arith.constant 0 : i32
    %c0_i32_2 = arith.constant 0 : i32
    return %c0_i32, %c0_i32_0, %c0_i32_1 : i32, i32, i32
  }
  func.func @transform_4(%arg0: i32) -> (i32, i32) {
    %c0_i32 = arith.constant 0 : i32
    %c0_i32_0 = arith.constant 0 : i32
    %c0_i32_1 = arith.constant 0 : i32
    return %c0_i32, %c0_i32_0 : i32, i32
  }
  func.func @transform_5(%arg0: i32) -> (i32, i32) {
    %c0_i32 = arith.constant 0 : i32
    %c0_i32_0 = arith.constant 0 : i32
    %c0_i32_1 = arith.constant 0 : i32
    return %c0_i32, %c0_i32_0 : i32, i32
  }
  func.func @transform_6(%arg0: i32) -> (i32, i32) {
    %c0_i32 = arith.constant 0 : i32
    %c0_i32_0 = arith.constant 0 : i32
    %c0_i32_1 = arith.constant 0 : i32
    return %c0_i32, %c0_i32_0 : i32, i32
  }
  func.func @transform_7(%arg0: i32) -> (i32, i32, i32) {
    %c0_i32 = arith.constant 0 : i32
    %c0_i32_0 = arith.constant 0 : i32
    %c0_i32_1 = arith.constant 0 : i32
    return %arg0, %c0_i32, %c0_i32_0 : i32, i32, i32
  }
}

</mosaic_0001>

<llo_original>
// kernel: tpu_custom_call.1
$region0: #{tpu_custom_call.1}
  #allocation0 [shape = 'u32[]', space=smem, size = 0x4, offset = 0x4, fixed_abs, tag = 'smem constant byte address 0x4 - core index']
  #allocation1 [shape = 'u32[144,128]{1,0:T(1,128)}', space=vmem, size = 0x12000, scoped, tag = 'internal scratch']
  #allocation2 [shape = 'f32[4,20]{1,0:T(4,128)}', space=vmem, size = 0x800, scoped, tag = 'scratch operand']
  #allocation3 [shape = 'f32[8,20]{1,0:T(8,128)}', space=vmem, size = 0x1000, scoped, tag = 'scratch operand']
  %s0 = inlined_call_operand.vmem [shape: f32[2,4,16], index: 0, kind: input, shape index: {}]
  %s1 = inlined_call_operand.vmem [shape: f32[3,8,4], index: 1, kind: input, shape index: {}]
  %s2 = inlined_call_operand.vmem [shape: f32[8,1], index: 2, kind: input, shape index: {}]
  %s3 = inlined_call_operand.vmem [shape: f32[3,8,8], index: 3, kind: input, shape index: {}]
  %s4 = inlined_call_operand.vmem [shape: f32[8,1], index: 4, kind: input, shape index: {}]
  %s5 = inlined_call_operand.vmem [shape: f32[8,4], index: 5, kind: input, shape index: {}]
  %s6 = inlined_call_operand.vmem [shape: f32[8,1], index: 6, kind: input, shape index: {}]
  %s7 = inlined_call_operand.hbm [shape: f32[2,8,16], index: 7, kind: output, shape index: {}]
  %s8 = sld [smem:[#allocation0]]
  $region61: #{tpu_custom_call.1} parent=0
    _
  %s10 = ssub.s32 1, %s8
  %s11 = scalar_select 0, %s10, %s8
  $region1: #{tpu_custom_call.1} parent=0
    #allocation4 [shape = 'u8[8192]{0}', space=vmem, size = 0x2000, scoped, tag = 'output window, operand 0']
    #allocation5 [shape = 's32[2]{0}', space=sflag, size = 0x8, scoped, tag = 'scoped memory for tpu_custom_call.1']
    %12 = vsyncpa [#allocation5], 0
    %s13 = scalar_lea.sflag [#allocation5], 1
    %14 = vsyncpa %s13, 0
    loop: start=0, step=1, limit=4
    $region2: #{tpu_custom_call.1} parent=1 // loop_pre_header
      _
    $region3: #{tpu_custom_call.1} parent=1 // loop_header
      %s16 = sphi 0, %s20
      %p17 = scmp.ge.s32.totalorder %s16, 4
      %s26 = sphi 0, %s28
      %s29 = sphi 0, %s26
      %s30 = sphi 0, %s29
      %s46 = sphi 0, %s30
      %s50 = sphi 0, %s50
      %s52 = sphi 0, %s50
      %s53 = sphi 0, %s52
      %s67 = sphi 0, %s53
      %s71 = sphi 0, %s71
      %s73 = sphi 0, %s71
      %s74 = sphi 0, %s73
      %s88 = sphi 0, %s74
      %s92 = sphi 0, %s92
      %s94 = sphi 0, %s92
      %s95 = sphi 0, %s94
      %s109 = sphi 0, %s95
      %s113 = sphi 0, %s113
      %s115 = sphi 0, %s113
      %s116 = sphi 0, %s115
      %s130 = sphi 0, %s116
      %s134 = sphi 0, %s134
      %s136 = sphi 0, %s134
      %s137 = sphi 0, %s136
      %s151 = sphi 0, %s137
      %s155 = sphi 0, %s155
      %s157 = sphi 0, %s155
      %s158 = sphi 0, %s157
      %s172 = sphi 0, %s158
      %s178 = sphi 0, %s180
      %s181 = sphi 0, %s178
      %s182 = sphi 0, %s181
      %s198 = sphi 0, %s182
    $region4: #{tpu_custom_call.1} parent=1 // loop_header_branch
      %19 = sbr.rel (%p17) target = $region8
    $region5: #{tpu_custom_call.1} parent=1 // loop_body
      %s21 = ssub.s32 %s16, 1
      %s22 = ssub.s32 %s16, 2
      %s23 = sadd.s32 %s16, 1
      %s24 = ssub.s32 %s16, %s23
      %p25 = scmp.eq.s32.totalorder %s24, 0
      %s27 = sadd.s32 %s26, 1
      %s28 = scalar_select %p25, %s26, %s27
      %p31 = pneg %p25
      %p32 = scmp.eq.s32.totalorder %s16, 1
      %p33 = por %p31, %p32
      %p34 = scmp.ne.s32.totalorder %s26, %s29
      %p35 = scmp.eq.s32.totalorder %s16, 0
      %p36 = por %p34, %p35
      %p37 = scmp.ne.s32.totalorder %s26, %s29
      %p38 = scmp.eq.s32.totalorder %s21, 1
      %p39 = por %p37, %p38
      %p40 = scmp.ne.s32.totalorder %s29, %s30
      %p41 = scmp.eq.s32.totalorder %s21, 0
      %p42 = por %p40, %p41
      %p43 = scmp.ne.s32.totalorder %s29, %s30
      %p44 = scmp.eq.s32.totalorder %s22, 1
      %p45 = por %p43, %p44
      %p47 = scmp.ne.s32.totalorder %s30, %s46
      %p48 = scmp.eq.s32.totalorder %s22, 0
      %p49 = por %p47, %p48
      %s51 = sadd.s32 %s50, 1
      %p54 = scmp.eq.s32.totalorder %s16, 1
      %p55 = scmp.ne.s32.totalorder %s50, %s52
      %p56 = scmp.eq.s32.totalorder %s16, 0
      %p57 = por %p55, %p56
      %p58 = scmp.ne.s32.totalorder %s50, %s52
      %p59 = scmp.eq.s32.totalorder %s21, 1
      %p60 = por %p58, %p59
      %p61 = scmp.ne.s32.totalorder %s52, %s53
      %p62 = scmp.eq.s32.totalorder %s21, 0
      %p63 = por %p61, %p62
      %p64 = scmp.ne.s32.totalorder %s52, %s53
      %p65 = scmp.eq.s32.totalorder %s22, 1
      %p66 = por %p64, %p65
      %p68 = scmp.ne.s32.totalorder %s53, %s67
      %p69 = scmp.eq.s32.totalorder %s22, 0
      %p70 = por %p68, %p69
      %s72 = sadd.s32 %s71, 1
      %p75 = scmp.eq.s32.totalorder %s16, 1
      %p76 = scmp.ne.s32.totalorder %s71, %s73
      %p77 = scmp.eq.s32.totalorder %s16, 0
      %p78 = por %p76, %p77
      %p79 = scmp.ne.s32.totalorder %s71, %s73
      %p80 = scmp.eq.s32.totalorder %s21, 1
      %p81 = por %p79, %p80
      %p82 = scmp.ne.s32.totalorder %s73, %s74
      %p83 = scmp.eq.s32.totalorder %s21, 0
      %p84 = por %p82, %p83
      %p85 = scmp.ne.s32.totalorder %s73, %s74
      %p86 = scmp.eq.s32.totalorder %s22, 1
      %p87 = por %p85, %p86
      %p89 = scmp.ne.s32.totalorder %s74, %s88
      %p90 = scmp.eq.s32.totalorder %s22, 0
      %p91 = por %p89, %p90
      %s93 = sadd.s32 %s92, 1
      %p96 = scmp.eq.s32.totalorder %s16, 1
      %p97 = scmp.ne.s32.totalorder %s92, %s94
      %p98 = scmp.eq.s32.totalorder %s16, 0
      %p99 = por %p97, %p98
      %p100 = scmp.ne.s32.totalorder %s92, %s94
      %p101 = scmp.eq.s32.totalorder %s21, 1
      %p102 = por %p100, %p101
      %p103 = scmp.ne.s32.totalorder %s94, %s95
      %p104 = scmp.eq.s32.totalorder %s21, 0
      %p105 = por %p103, %p104
      %p106 = scmp.ne.s32.totalorder %s94, %s95
      %p107 = scmp.eq.s32.totalorder %s22, 1
      %p108 = por %p106, %p107
      %p110 = scmp.ne.s32.totalorder %s95, %s109
      %p111 = scmp.eq.s32.totalorder %s22, 0
      %p112 = por %p110, %p111
      %s114 = sadd.s32 %s113, 1
      %p117 = scmp.eq.s32.totalorder %s16, 1
      %p118 = scmp.ne.s32.totalorder %s113, %s115
      %p119 = scmp.eq.s32.totalorder %s16, 0
      %p120 = por %p118, %p119
      %p121 = scmp.ne.s32.totalorder %s113, %s115
      %p122 = scmp.eq.s32.totalorder %s21, 1
      %p123 = por %p121, %p122
      %p124 = scmp.ne.s32.totalorder %s115, %s116
      %p125 = scmp.eq.s32.totalorder %s21, 0
      %p126 = por %p124, %p125
      %p127 = scmp.ne.s32.totalorder %s115, %s116
      %p128 = scmp.eq.s32.totalorder %s22, 1
      %p129 = por %p127, %p128
      %p131 = scmp.ne.s32.totalorder %s116, %s130
      %p132 = scmp.eq.s32.totalorder %s22, 0
      %p133 = por %p131, %p132
      %s135 = sadd.s32 %s134, 1
      %p138 = scmp.eq.s32.totalorder %s16, 1
      %p139 = scmp.ne.s32.totalorder %s134, %s136
      %p140 = scmp.eq.s32.totalorder %s16, 0
      %p141 = por %p139, %p140
      %p142 = scmp.ne.s32.totalorder %s134, %s136
      %p143 = scmp.eq.s32.totalorder %s21, 1
      %p144 = por %p142, %p143
      %p145 = scmp.ne.s32.totalorder %s136, %s137
      %p146 = scmp.eq.s32.totalorder %s21, 0
      %p147 = por %p145, %p146
      %p148 = scmp.ne.s32.totalorder %s136, %s137
      %p149 = scmp.eq.s32.totalorder %s22, 1
      %p150 = por %p148, %p149
      %p152 = scmp.ne.s32.totalorder %s137, %s151
      %p153 = scmp.eq.s32.totalorder %s22, 0
      %p154 = por %p152, %p153
      %s156 = sadd.s32 %s155, 1
      %p159 = scmp.eq.s32.totalorder %s16, 1
      %p160 = scmp.ne.s32.totalorder %s155, %s157
      %p161 = scmp.eq.s32.totalorder %s16, 0
      %p162 = por %p160, %p161
      %p163 = scmp.ne.s32.totalorder %s155, %s157
      %p164 = scmp.eq.s32.totalorder %s21, 1
      %p165 = por %p163, %p164
      %p166 = scmp.ne.s32.totalorder %s157, %s158
      %p167 = scmp.eq.s32.totalorder %s21, 0
      %p168 = por %p166, %p167
      %p169 = scmp.ne.s32.totalorder %s157, %s158
      %p170 = scmp.eq.s32.totalorder %s22, 1
      %p171 = por %p169, %p170
      %p173 = scmp.ne.s32.totalorder %s158, %s172
      %p174 = scmp.eq.s32.totalorder %s22, 0
      %p175 = por %p173, %p174
      %s176 = ssub.s32 %s16, %s23
      %p177 = scmp.eq.s32.totalorder %s176, 0
      %s179 = sadd.s32 %s178, 1
      %s180 = scalar_select %p177, %s178, %s179
      %p183 = pneg %p177
      %p184 = scmp.eq.s32.totalorder %s16, 1
      %p185 = por %p183, %p184
      %p186 = scmp.ne.s32.totalorder %s178, %s181
      %p187 = scmp.eq.s32.totalorder %s16, 0
      %p188 = por %p186, %p187
      %p189 = scmp.ne.s32.totalorder %s178, %s181
      %p190 = scmp.eq.s32.totalorder %s21, 1
      %p191 = por %p189, %p190
      %p192 = scmp.ne.s32.totalorder %s181, %s182
      %p193 = scmp.eq.s32.totalorder %s21, 0
      %p194 = por %p192, %p193
      %p195 = scmp.ne.s32.totalorder %s181, %s182
      %p196 = scmp.eq.s32.totalorder %s22, 1
      %p197 = por %p195, %p196
      %p199 = scmp.ne.s32.totalorder %s182, %s198
      %p200 = scmp.eq.s32.totalorder %s22, 0
      %p201 = por %p199, %p200
      %p202 = scmp.le.s32.totalorder 1, %s16
      %p203 = scmp.lt.s32.totalorder %s16, 3
      %p204 = pnand %p202, %p203
      %p205 = pneg %p204
      // Predicated region
      $region9: #{tpu_custom_call.1} parent=5 // pred_check
        _
      $region10: #{tpu_custom_call.1} parent=5 // pred_check_branch
        %207 = sbr.rel (%p204) target = $region12
      $region11: #{tpu_custom_call.1} parent=5 // pred_region
        %s208 = ssub.s32 %s16, 1
        // Predicated region
        $region13: #{tpu_custom_call.1} parent=11 // pred_check
          %p209 = pneg %p63
        $region14: #{tpu_custom_call.1} parent=11 // pred_check_branch
          %211 = sbr.rel (%p209) target = $region16
        $region15: #{tpu_custom_call.1} parent=11 // pred_region
          _
        $region16: #{tpu_custom_call.1} parent=11 // pred_fallthru
          _
        // Predicated region
        $region17: #{tpu_custom_call.1} parent=11 // pred_check
          %p212 = pneg %p84
        $region18: #{tpu_custom_call.1} parent=11 // pred_check_branch
          %214 = sbr.rel (%p212) target = $region20
        $region19: #{tpu_custom_call.1} parent=11 // pred_region
          _
        $region20: #{tpu_custom_call.1} parent=11 // pred_fallthru
          _
        // Predicated region
        $region21: #{tpu_custom_call.1} parent=11 // pred_check
          %p215 = pneg %p105
        $region22: #{tpu_custom_call.1} parent=11 // pred_check_branch
          %217 = sbr.rel (%p215) target = $region24
        $region23: #{tpu_custom_call.1} parent=11 // pred_region
          _
        $region24: #{tpu_custom_call.1} parent=11 // pred_fallthru
          _
        // Predicated region
        $region25: #{tpu_custom_call.1} parent=11 // pred_check
          %p218 = pneg %p126
        $region26: #{tpu_custom_call.1} parent=11 // pred_check_branch
          %220 = sbr.rel (%p218) target = $region28
        $region27: #{tpu_custom_call.1} parent=11 // pred_region
          _
        $region28: #{tpu_custom_call.1} parent=11 // pred_fallthru
          _
        // Predicated region
        $region29: #{tpu_custom_call.1} parent=11 // pred_check
          %p221 = pneg %p147
        $region30: #{tpu_custom_call.1} parent=11 // pred_check_branch
          %223 = sbr.rel (%p221) target = $region32
        $region31: #{tpu_custom_call.1} parent=11 // pred_region
          _
        $region32: #{tpu_custom_call.1} parent=11 // pred_fallthru
          _
        // Predicated region
        $region33: #{tpu_custom_call.1} parent=11 // pred_check
          %p224 = pneg %p168
        $region34: #{tpu_custom_call.1} parent=11 // pred_check_branch
          %226 = sbr.rel (%p224) target = $region36
        $region35: #{tpu_custom_call.1} parent=11 // pred_region
          _
        $region36: #{tpu_custom_call.1} parent=11 // pred_fallthru
          _
      $region12: #{tpu_custom_call.1} parent=5 // pred_fallthru
        _
      %p227 = scmp.lt.s32.totalorder %s16, 2
      // Predicated region
      $region37: #{tpu_custom_call.1} parent=5 // pred_check
        %p228 = pneg %p227
      $region38: #{tpu_custom_call.1} parent=5 // pred_check_branch
        %230 = sbr.rel (%p228) target = $region40
      $region39: #{tpu_custom_call.1} parent=5 // pred_region
        // Predicated region
        $region41: #{tpu_custom_call.1} parent=39 // pred_check
          %p231 = pneg %p36
        $region42: #{tpu_custom_call.1} parent=39 // pred_check_branch
          %233 = sbr.rel (%p231) target = $region44
        $region43: #{tpu_custom_call.1} parent=39 // pred_region
          %p234 = scmp.lt.s32.totalorder %s16, 1
          %s235 = scalar_select %p234, %s16, 1
          %s236 = smul.addr %s235, 4
          %s237 = scalar_lea.vmem %s0, %s236
        $region44: #{tpu_custom_call.1} parent=39 // pred_fallthru
          _
      $region40: #{tpu_custom_call.1} parent=5 // pred_fallthru
        _
      %p238 = scmp.le.s32.totalorder 1, %s16
      %p239 = scmp.lt.s32.totalorder %s16, 3
      %p240 = pnand %p238, %p239
      %p241 = pneg %p240
      // Predicated region
      $region45: #{tpu_custom_call.1} parent=5 // pred_check
        _
      $region46: #{tpu_custom_call.1} parent=5 // pred_check_branch
        %243 = sbr.rel (%p240) target = $region48
      $region47: #{tpu_custom_call.1} parent=5 // pred_region
        %s244 = ssub.s32 %s16, 1
        %p245 = scmp.lt.s32.totalorder %s21, 1
        %s246 = scalar_select %p245, %s21, 1
        %s247 = smul.addr %s246, 4
        %s248 = scalar_lea.vmem %s0, %s247
        %p249 = pneg %p42
        %p250 = pneg %p39
        %p251 = pneg %p63
        %p252 = pneg %p60
        %p253 = pneg %p84
        %p254 = pneg %p81
        %p255 = pneg %p105
        %p256 = pneg %p102
        %p257 = pneg %p126
        %p258 = pneg %p123
        %p259 = pneg %p147
        %p260 = pneg %p144
        %p261 = pneg %p168
        %p262 = pneg %p165
        %p263 = pneg %p194
        %p264 = pneg %p191
        %s265 = sand.u32 %s181, 1
        %s266 = scalar_lea.sflag [#allocation5], %s265
        %s267 = sand.u32 %s181, 1
        %s268 = smul.addr %s267, 8
        %s269 = scalar_lea.vmem [#allocation4], %s268
        %p270 = scmp.lt.s32.totalorder %s21, 1
        %s271 = scalar_select %p270, %s21, 1
        %s272 = smul.addr %s271, 4
        %s273 = scalar_lea.vmem %s0, %s272
        %v274 = vld [vmem:[%s273] sm:$0xf]
        %vm275 = vcmask 158720
        %276 = vst.msk [vmem:[#allocation2] sm:$0xf] %vm275, 0.0
        %278 = vrot.lane.b32.xlu0 %v274, 4
        %v279 = vpop.permute.xlu0 %278
        %vm281 = vcmask 158752
        %282 = vst.msk [vmem:[#allocation2] sm:$0xf] %vm281, %v279
        %v283 = vld [vmem:[%s1] sm:$0xff]
        %v284 = vld [vmem:[#allocation2] sm:$0xf]
        %s285 = scalar_lea.vmem %s1, 8
        %v286 = vld [vmem:[%s285] sm:$0xff]
        %288 = vrot.lane.b32.xlu0 %v284, 126
        %v289 = vpop.permute.xlu0 %288
        %vm290 = vcmask 31744
        %v292 = vsel %vm290, %v286, 0
        %vm294 = vcmask 1043456
        %v295 = vsel %vm294, %v289, 0
        %297 = vmatprep.subr.mxu0 0.0
        %298 = vmatpush1.msra.mxu0 0.0
        %299 = vmatprep.subr.mxu0 0.0
        %300 = vmatpush1.msra.mxu0 0.0
        %301 = vmatprep.subr.mxu0 0.0
        %302 = vmatpush1.msra.mxu0 0.0
        %303 = vmatprep.subr.mxu0 0.0
        %304 = vmatpush1.msra.mxu0 0.0
        %305 = vmatprep.subr.mxu0 0.0
        %306 = vmatpush1.msra.mxu0 0.0
        %307 = vmatprep.subr.mxu0 0.0
        %308 = vmatpush1.msra.mxu0 0.0
        %309 = vmatprep.subr.mxu0 0.0
        %310 = vmatpush1.msra.mxu0 0.0
        %311 = vmatprep.subr.mxu0 0.0
        %312 = vmatpush1.msra.mxu0 0.0
        %313 = vmatprep.subr.mxu0 0.0
        %314 = vmatpush1.msra.mxu0 0.0
        %315 = vmatprep.subr.mxu0 0.0
        %316 = vmatpush1.msra.mxu0 0.0
        %317 = vmatprep.subr.mxu0 0.0
        %318 = vmatpush1.msra.mxu0 0.0
        %319 = vmatprep.subr.mxu0 0.0
        %320 = vmatpush1.msra.mxu0 0.0
        %321 = vmatprep.subr.mxu0 0.0
        %322 = vmatpush1.msra.mxu0 0.0
        %323 = vmatprep.subr.mxu0 0.0
        %324 = vmatpush1.msra.mxu0 0.0
        %325 = vmatprep.subr.mxu0 0.0
        %326 = vmatpush1.msra.mxu0 0.0
        %327 = vmatprep.subr.mxu0 0.0
        %328 = vmatpush1.msra.mxu0 %v295
        %329 = vmatprep.subr.mxu0 0.0
        %330 = vmatpush2.msra.mxu0 0.0
        %331 = vmatprep.subr.mxu0 0.0
        %332 = vmatpush2.msra.mxu0 0.0
        %333 = vmatprep.subr.mxu0 0.0
        %334 = vmatpush2.msra.mxu0 0.0
        %335 = vmatprep.subr.mxu0 0.0
        %336 = vmatpush2.msra.mxu0 0.0
        %337 = vmatprep.subr.mxu0 0.0
        %338 = vmatpush2.msra.mxu0 0.0
        %339 = vmatprep.subr.mxu0 0.0
        %340 = vmatpush2.msra.mxu0 0.0
        %341 = vmatprep.subr.mxu0 0.0
        %342 = vmatpush2.msra.mxu0 0.0
        %343 = vmatprep.subr.mxu0 0.0
        %344 = vmatpush2.msra.mxu0 0.0
        %345 = vmatprep.subr.mxu0 0.0
        %346 = vmatpush2.msra.mxu0 0.0
        %347 = vmatprep.subr.mxu0 0.0
        %348 = vmatpush2.msra.mxu0 0.0
        %349 = vmatprep.subr.mxu0 0.0
        %350 = vmatpush2.msra.mxu0 0.0
        %351 = vmatprep.subr.mxu0 0.0
        %352 = vmatpush2.msra.mxu0 0.0
        %353 = vmatprep.subr.mxu0 0.0
        %354 = vmatpush2.msra.mxu0 0.0
        %355 = vmatprep.subr.mxu0 0.0
        %356 = vmatpush2.msra.mxu0 0.0
        %357 = vmatprep.subr.mxu0 0.0
        %358 = vmatpush2.msra.mxu0 0.0
        %359 = vmatprep.subr.mxu0 0.0
        %360 = vmatpush2.msra.mxu0 0.0
        %361 = vmatprep.mubr.f32.mxu0 0.0
        %362 = vmatmul.mubr.f32.gmra.mxu0 %v292
        %v363 = vpop.f32.mrf.mxu0
        %v364 = vadd.f32 0.0, %v363
        %v365 = vpop.f32.mrf.mxu0
        %366 = vdwg.mxu0
        %v368 = vsel %vm290, %v283, 0
        %v370 = vsel %vm294, %v284, 0
        %372 = vmatprep.subr.mxu0 0.0
        %373 = vmatpush1.msra.mxu0 0.0
        %374 = vmatprep.subr.mxu0 0.0
        %375 = vmatpush1.msra.mxu0 0.0
        %376 = vmatprep.subr.mxu0 0.0
        %377 = vmatpush1.msra.mxu0 0.0
        %378 = vmatprep.subr.mxu0 0.0
        %379 = vmatpush1.msra.mxu0 0.0
        %380 = vmatprep.subr.mxu0 0.0
        %381 = vmatpush1.msra.mxu0 0.0
        %382 = vmatprep.subr.mxu0 0.0
        %383 = vmatpush1.msra.mxu0 0.0
        %384 = vmatprep.subr.mxu0 0.0
        %385 = vmatpush1.msra.mxu0 0.0
        %386 = vmatprep.subr.mxu0 0.0
        %387 = vmatpush1.msra.mxu0 0.0
        %388 = vmatprep.subr.mxu0 0.0
        %389 = vmatpush1.msra.mxu0 0.0
        %390 = vmatprep.subr.mxu0 0.0
        %391 = vmatpush1.msra.mxu0 0.0
        %392 = vmatprep.subr.mxu0 0.0
        %393 = vmatpush1.msra.mxu0 0.0
        %394 = vmatprep.subr.mxu0 0.0
        %395 = vmatpush1.msra.mxu0 0.0
        %396 = vmatprep.subr.mxu0 0.0
        %397 = vmatpush1.msra.mxu0 0.0
        %398 = vmatprep.subr.mxu0 0.0
        %399 = vmatpush1.msra.mxu0 0.0
        %400 = vmatprep.subr.mxu0 0.0
        %401 = vmatpush1.msra.mxu0 0.0
        %402 = vmatprep.subr.mxu0 0.0
        %403 = vmatpush1.msra.mxu0 %v370
        %404 = vmatprep.subr.mxu0 0.0
        %405 = vmatpush2.msra.mxu0 0.0
        %406 = vmatprep.subr.mxu0 0.0
        %407 = vmatpush2.msra.mxu0 0.0
        %408 = vmatprep.subr.mxu0 0.0
        %409 = vmatpush2.msra.mxu0 0.0
        %410 = vmatprep.subr.mxu0 0.0
        %411 = vmatpush2.msra.mxu0 0.0
        %412 = vmatprep.subr.mxu0 0.0
        %413 = vmatpush2.msra.mxu0 0.0
        %414 = vmatprep.subr.mxu0 0.0
        %415 = vmatpush2.msra.mxu0 0.0
        %416 = vmatprep.subr.mxu0 0.0
        %417 = vmatpush2.msra.mxu0 0.0
        %418 = vmatprep.subr.mxu0 0.0
        %419 = vmatpush2.msra.mxu0 0.0
        %420 = vmatprep.subr.mxu0 0.0
        %421 = vmatpush2.msra.mxu0 0.0
        %422 = vmatprep.subr.mxu0 0.0
        %423 = vmatpush2.msra.mxu0 0.0
        %424 = vmatprep.subr.mxu0 0.0
        %425 = vmatpush2.msra.mxu0 0.0
        %426 = vmatprep.subr.mxu0 0.0
        %427 = vmatpush2.msra.mxu0 0.0
        %428 = vmatprep.subr.mxu0 0.0
        %429 = vmatpush2.msra.mxu0 0.0
        %430 = vmatprep.subr.mxu0 0.0
        %431 = vmatpush2.msra.mxu0 0.0
        %432 = vmatprep.subr.mxu0 0.0
        %433 = vmatpush2.msra.mxu0 0.0
        %434 = vmatprep.subr.mxu0 0.0
        %435 = vmatpush2.msra.mxu0 0.0
        %436 = vmatprep.mubr.f32.mxu0 0.0
        %437 = vmatmul.mubr.f32.gmra.mxu0 %v368
        %v438 = vpop.f32.mrf.mxu0
        %v439 = vadd.f32 %v364, %v438
        %v440 = vpop.f32.mrf.mxu0
        %441 = vdwg.mxu0
        %s442 = scalar_lea.vmem %s1, 16
        %v443 = vld [vmem:[%s442] sm:$0xff]
        %444 = vrot.lane.b32.xlu0 %v284, 124
        %v445 = vpop.permute.xlu0 %444
        %v447 = vsel %vm290, %v443, 0
        %v449 = vsel %vm294, %v445, 0
        %451 = vmatprep.subr.mxu0 0.0
        %452 = vmatpush1.msra.mxu0 0.0
        %453 = vmatprep.subr.mxu0 0.0
        %454 = vmatpush1.msra.mxu0 0.0
        %455 = vmatprep.subr.mxu0 0.0
        %456 = vmatpush1.msra.mxu0 0.0
        %457 = vmatprep.subr.mxu0 0.0
        %458 = vmatpush1.msra.mxu0 0.0
        %459 = vmatprep.subr.mxu0 0.0
        %460 = vmatpush1.msra.mxu0 0.0
        %461 = vmatprep.subr.mxu0 0.0
        %462 = vmatpush1.msra.mxu0 0.0
        %463 = vmatprep.subr.mxu0 0.0
        %464 = vmatpush1.msra.mxu0 0.0
        %465 = vmatprep.subr.mxu0 0.0
        %466 = vmatpush1.msra.mxu0 0.0
        %467 = vmatprep.subr.mxu0 0.0
        %468 = vmatpush1.msra.mxu0 0.0
        %469 = vmatprep.subr.mxu0 0.0
        %470 = vmatpush1.msra.mxu0 0.0
        %471 = vmatprep.subr.mxu0 0.0
        %472 = vmatpush1.msra.mxu0 0.0
        %473 = vmatprep.subr.mxu0 0.0
        %474 = vmatpush1.msra.mxu0 0.0
        %475 = vmatprep.subr.mxu0 0.0
        %476 = vmatpush1.msra.mxu0 0.0
        %477 = vmatprep.subr.mxu0 0.0
        %478 = vmatpush1.msra.mxu0 0.0
        %479 = vmatprep.subr.mxu0 0.0
        %480 = vmatpush1.msra.mxu0 0.0
        %481 = vmatprep.subr.mxu0 0.0
        %482 = vmatpush1.msra.mxu0 %v449
        %483 = vmatprep.subr.mxu0 0.0
        %484 = vmatpush2.msra.mxu0 0.0
        %485 = vmatprep.subr.mxu0 0.0
        %486 = vmatpush2.msra.mxu0 0.0
        %487 = vmatprep.subr.mxu0 0.0
        %488 = vmatpush2.msra.mxu0 0.0
        %489 = vmatprep.subr.mxu0 0.0
        %490 = vmatpush2.msra.mxu0 0.0
        %491 = vmatprep.subr.mxu0 0.0
        %492 = vmatpush2.msra.mxu0 0.0
        %493 = vmatprep.subr.mxu0 0.0
        %494 = vmatpush2.msra.mxu0 0.0
        %495 = vmatprep.subr.mxu0 0.0
        %496 = vmatpush2.msra.mxu0 0.0
        %497 = vmatprep.subr.mxu0 0.0
        %498 = vmatpush2.msra.mxu0 0.0
        %499 = vmatprep.subr.mxu0 0.0
        %500 = vmatpush2.msra.mxu0 0.0
        %501 = vmatprep.subr.mxu0 0.0
        %502 = vmatpush2.msra.mxu0 0.0
        %503 = vmatprep.subr.mxu0 0.0
        %504 = vmatpush2.msra.mxu0 0.0
        %505 = vmatprep.subr.mxu0 0.0
        %506 = vmatpush2.msra.mxu0 0.0
        %507 = vmatprep.subr.mxu0 0.0
        %508 = vmatpush2.msra.mxu0 0.0
        %509 = vmatprep.subr.mxu0 0.0
        %510 = vmatpush2.msra.mxu0 0.0
        %511 = vmatprep.subr.mxu0 0.0
        %512 = vmatpush2.msra.mxu0 0.0
        %513 = vmatprep.subr.mxu0 0.0
        %514 = vmatpush2.msra.mxu0 0.0
        %515 = vmatprep.mubr.f32.mxu0 0.0
        %516 = vmatmul.mubr.f32.gmra.mxu0 %v447
        %v517 = vpop.f32.mrf.mxu0
        %v518 = vadd.f32 0.0, %v517
        %v519 = vpop.f32.mrf.mxu0
        %520 = vdwg.mxu0
        %v521 = vadd.f32 %v439, %v518
        %v522 = vld [vmem:[%s2] sm:$0xff]
        %524 = vset.pattern.permute.xlu0 0
        %525 = vperm.xlu0 %524, %v522
        %v526 = vpop.permute.xlu0 %525
        %v528 = vadd.f32 %v521, %v526
        %v529 = vmax.f32 %v528, 0.0
        %vm530 = vcmask 162816
        %531 = vst.msk [vmem:[#allocation3] sm:$0xff] %vm530, 0.0
        %533 = vrot.lane.b32.xlu0 %v529, 4
        %v534 = vpop.permute.xlu0 %533
        %vm536 = vcmask 162848
        %537 = vst.msk [vmem:[#allocation3] sm:$0xff] %vm536, %v534
        %v538 = vld [vmem:[%s3] sm:$0xff]
        %v539 = vld [vmem:[#allocation3] sm:$0xff]
        %s540 = scalar_lea.vmem %s3, 8
        %v541 = vld [vmem:[%s540] sm:$0xff]
        %543 = vrot.lane.b32.xlu0 %v539, 126
        %v544 = vpop.permute.xlu0 %543
        %vm546 = vcmask 64512
        %v548 = vsel %vm546, %v541, 0
        %550 = vmatprep.subr.mxu0 0.0
        %551 = vmatpush1.msra.mxu0 0.0
        %552 = vmatprep.subr.mxu0 0.0
        %553 = vmatpush1.msra.mxu0 0.0
        %554 = vmatprep.subr.mxu0 0.0
        %555 = vmatpush1.msra.mxu0 0.0
        %556 = vmatprep.subr.mxu0 0.0
        %557 = vmatpush1.msra.mxu0 0.0
        %558 = vmatprep.subr.mxu0 0.0
        %559 = vmatpush1.msra.mxu0 0.0
        %560 = vmatprep.subr.mxu0 0.0
        %561 = vmatpush1.msra.mxu0 0.0
        %562 = vmatprep.subr.mxu0 0.0
        %563 = vmatpush1.msra.mxu0 0.0
        %564 = vmatprep.subr.mxu0 0.0
        %565 = vmatpush1.msra.mxu0 0.0
        %566 = vmatprep.subr.mxu0 0.0
        %567 = vmatpush1.msra.mxu0 0.0
        %568 = vmatprep.subr.mxu0 0.0
        %569 = vmatpush1.msra.mxu0 0.0
        %570 = vmatprep.subr.mxu0 0.0
        %571 = vmatpush1.msra.mxu0 0.0
        %572 = vmatprep.subr.mxu0 0.0
        %573 = vmatpush1.msra.mxu0 0.0
        %574 = vmatprep.subr.mxu0 0.0
        %575 = vmatpush1.msra.mxu0 0.0
        %576 = vmatprep.subr.mxu0 0.0
        %577 = vmatpush1.msra.mxu0 0.0
        %578 = vmatprep.subr.mxu0 0.0
        %579 = vmatpush1.msra.mxu0 0.0
        %580 = vmatprep.subr.mxu0 0.0
        %581 = vmatpush1.msra.mxu0 %v544
        %582 = vmatprep.subr.mxu0 0.0
        %583 = vmatpush2.msra.mxu0 0.0
        %584 = vmatprep.subr.mxu0 0.0
        %585 = vmatpush2.msra.mxu0 0.0
        %586 = vmatprep.subr.mxu0 0.0
        %587 = vmatpush2.msra.mxu0 0.0
        %588 = vmatprep.subr.mxu0 0.0
        %589 = vmatpush2.msra.mxu0 0.0
        %590 = vmatprep.subr.mxu0 0.0
        %591 = vmatpush2.msra.mxu0 0.0
        %592 = vmatprep.subr.mxu0 0.0
        %593 = vmatpush2.msra.mxu0 0.0
        %594 = vmatprep.subr.mxu0 0.0
        %595 = vmatpush2.msra.mxu0 0.0
        %596 = vmatprep.subr.mxu0 0.0
        %597 = vmatpush2.msra.mxu0 0.0
        %598 = vmatprep.subr.mxu0 0.0
        %599 = vmatpush2.msra.mxu0 0.0
        %600 = vmatprep.subr.mxu0 0.0
        %601 = vmatpush2.msra.mxu0 0.0
        %602 = vmatprep.subr.mxu0 0.0
        %603 = vmatpush2.msra.mxu0 0.0
        %604 = vmatprep.subr.mxu0 0.0
        %605 = vmatpush2.msra.mxu0 0.0
        %606 = vmatprep.subr.mxu0 0.0
        %607 = vmatpush2.msra.mxu0 0.0
        %608 = vmatprep.subr.mxu0 0.0
        %609 = vmatpush2.msra.mxu0 0.0
        %610 = vmatprep.subr.mxu0 0.0
        %611 = vmatpush2.msra.mxu0 0.0
        %612 = vmatprep.subr.mxu0 0.0
        %613 = vmatpush2.msra.mxu0 0.0
        %614 = vmatprep.mubr.f32.mxu0 0.0
        %615 = vmatmul.mubr.f32.gmra.mxu0 %v548
        %v616 = vpop.f32.mrf.mxu0
        %v617 = vadd.f32 0.0, %v616
        %v618 = vpop.f32.mrf.mxu0
        %619 = vdwg.mxu0
        %v621 = vsel %vm546, %v538, 0
        %623 = vmatprep.subr.mxu0 0.0
        %624 = vmatpush1.msra.mxu0 0.0
        %625 = vmatprep.subr.mxu0 0.0
        %626 = vmatpush1.msra.mxu0 0.0
        %627 = vmatprep.subr.mxu0 0.0
        %628 = vmatpush1.msra.mxu0 0.0
        %629 = vmatprep.subr.mxu0 0.0
        %630 = vmatpush1.msra.mxu0 0.0
        %631 = vmatprep.subr.mxu0 0.0
        %632 = vmatpush1.msra.mxu0 0.0
        %633 = vmatprep.subr.mxu0 0.0
        %634 = vmatpush1.msra.mxu0 0.0
        %635 = vmatprep.subr.mxu0 0.0
        %636 = vmatpush1.msra.mxu0 0.0
        %637 = vmatprep.subr.mxu0 0.0
        %638 = vmatpush1.msra.mxu0 0.0
        %639 = vmatprep.subr.mxu0 0.0
        %640 = vmatpush1.msra.mxu0 0.0
        %641 = vmatprep.subr.mxu0 0.0
        %642 = vmatpush1.msra.mxu0 0.0
        %643 = vmatprep.subr.mxu0 0.0
        %644 = vmatpush1.msra.mxu0 0.0
        %645 = vmatprep.subr.mxu0 0.0
        %646 = vmatpush1.msra.mxu0 0.0
        %647 = vmatprep.subr.mxu0 0.0
        %648 = vmatpush1.msra.mxu0 0.0
        %649 = vmatprep.subr.mxu0 0.0
        %650 = vmatpush1.msra.mxu0 0.0
        %651 = vmatprep.subr.mxu0 0.0
        %652 = vmatpush1.msra.mxu0 0.0
        %653 = vmatprep.subr.mxu0 0.0
        %654 = vmatpush1.msra.mxu0 %v539
        %655 = vmatprep.subr.mxu0 0.0
        %656 = vmatpush2.msra.mxu0 0.0
        %657 = vmatprep.subr.mxu0 0.0
        %658 = vmatpush2.msra.mxu0 0.0
        %659 = vmatprep.subr.mxu0 0.0
        %660 = vmatpush2.msra.mxu0 0.0
        %661 = vmatprep.subr.mxu0 0.0
        %662 = vmatpush2.msra.mxu0 0.0
        %663 = vmatprep.subr.mxu0 0.0
        %664 = vmatpush2.msra.mxu0 0.0
        %665 = vmatprep.subr.mxu0 0.0
        %666 = vmatpush2.msra.mxu0 0.0
        %667 = vmatprep.subr.mxu0 0.0
        %668 = vmatpush2.msra.mxu0 0.0
        %669 = vmatprep.subr.mxu0 0.0
        %670 = vmatpush2.msra.mxu0 0.0
        %671 = vmatprep.subr.mxu0 0.0
        %672 = vmatpush2.msra.mxu0 0.0
        %673 = vmatprep.subr.mxu0 0.0
        %674 = vmatpush2.msra.mxu0 0.0
        %675 = vmatprep.subr.mxu0 0.0
        %676 = vmatpush2.msra.mxu0 0.0
        %677 = vmatprep.subr.mxu0 0.0
        %678 = vmatpush2.msra.mxu0 0.0
        %679 = vmatprep.subr.mxu0 0.0
        %680 = vmatpush2.msra.mxu0 0.0
        %681 = vmatprep.subr.mxu0 0.0
        %682 = vmatpush2.msra.mxu0 0.0
        %683 = vmatprep.subr.mxu0 0.0
        %684 = vmatpush2.msra.mxu0 0.0
        %685 = vmatprep.subr.mxu0 0.0
        %686 = vmatpush2.msra.mxu0 0.0
        %687 = vmatprep.mubr.f32.mxu0 0.0
        %688 = vmatmul.mubr.f32.gmra.mxu0 %v621
        %v689 = vpop.f32.mrf.mxu0
        %v690 = vadd.f32 %v617, %v689
        %v691 = vpop.f32.mrf.mxu0
        %692 = vdwg.mxu0
        %s693 = scalar_lea.vmem %s3, 16
        %v694 = vld [vmem:[%s693] sm:$0xff]
        %695 = vrot.lane.b32.xlu0 %v539, 124
        %v696 = vpop.permute.xlu0 %695
        %v699 = vsel %vm546, %v694, 0
        %701 = vmatprep.subr.mxu0 0.0
        %702 = vmatpush1.msra.mxu0 0.0
        %703 = vmatprep.subr.mxu0 0.0
        %704 = vmatpush1.msra.mxu0 0.0
        %705 = vmatprep.subr.mxu0 0.0
        %706 = vmatpush1.msra.mxu0 0.0
        %707 = vmatprep.subr.mxu0 0.0
        %708 = vmatpush1.msra.mxu0 0.0
        %709 = vmatprep.subr.mxu0 0.0
        %710 = vmatpush1.msra.mxu0 0.0
        %711 = vmatprep.subr.mxu0 0.0
        %712 = vmatpush1.msra.mxu0 0.0
        %713 = vmatprep.subr.mxu0 0.0
        %714 = vmatpush1.msra.mxu0 0.0
        %715 = vmatprep.subr.mxu0 0.0
        %716 = vmatpush1.msra.mxu0 0.0
        %717 = vmatprep.subr.mxu0 0.0
        %718 = vmatpush1.msra.mxu0 0.0
        %719 = vmatprep.subr.mxu0 0.0
        %720 = vmatpush1.msra.mxu0 0.0
        %721 = vmatprep.subr.mxu0 0.0
        %722 = vmatpush1.msra.mxu0 0.0
        %723 = vmatprep.subr.mxu0 0.0
        %724 = vmatpush1.msra.mxu0 0.0
        %725 = vmatprep.subr.mxu0 0.0
        %726 = vmatpush1.msra.mxu0 0.0
        %727 = vmatprep.subr.mxu0 0.0
        %728 = vmatpush1.msra.mxu0 0.0
        %729 = vmatprep.subr.mxu0 0.0
        %730 = vmatpush1.msra.mxu0 0.0
        %731 = vmatprep.subr.mxu0 0.0
        %732 = vmatpush1.msra.mxu0 %v696
        %733 = vmatprep.subr.mxu0 0.0
        %734 = vmatpush2.msra.mxu0 0.0
        %735 = vmatprep.subr.mxu0 0.0
        %736 = vmatpush2.msra.mxu0 0.0
        %737 = vmatprep.subr.mxu0 0.0
        %738 = vmatpush2.msra.mxu0 0.0
        %739 = vmatprep.subr.mxu0 0.0
        %740 = vmatpush2.msra.mxu0 0.0
        %741 = vmatprep.subr.mxu0 0.0
        %742 = vmatpush2.msra.mxu0 0.0
        %743 = vmatprep.subr.mxu0 0.0
        %744 = vmatpush2.msra.mxu0 0.0
        %745 = vmatprep.subr.mxu0 0.0
        %746 = vmatpush2.msra.mxu0 0.0
        %747 = vmatprep.subr.mxu0 0.0
        %748 = vmatpush2.msra.mxu0 0.0
        %749 = vmatprep.subr.mxu0 0.0
        %750 = vmatpush2.msra.mxu0 0.0
        %751 = vmatprep.subr.mxu0 0.0
        %752 = vmatpush2.msra.mxu0 0.0
        %753 = vmatprep.subr.mxu0 0.0
        %754 = vmatpush2.msra.mxu0 0.0
        %755 = vmatprep.subr.mxu0 0.0
        %756 = vmatpush2.msra.mxu0 0.0
        %757 = vmatprep.subr.mxu0 0.0
        %758 = vmatpush2.msra.mxu0 0.0
        %759 = vmatprep.subr.mxu0 0.0
        %760 = vmatpush2.msra.mxu0 0.0
        %761 = vmatprep.subr.mxu0 0.0
        %762 = vmatpush2.msra.mxu0 0.0
        %763 = vmatprep.subr.mxu0 0.0
        %764 = vmatpush2.msra.mxu0 0.0
        %765 = vmatprep.mubr.f32.mxu0 0.0
        %766 = vmatmul.mubr.f32.gmra.mxu0 %v699
        %v767 = vpop.f32.mrf.mxu0
        %v768 = vadd.f32 0.0, %v767
        %v769 = vpop.f32.mrf.mxu0
        %770 = vdwg.mxu0
        %v771 = vadd.f32 %v690, %v768
        %v772 = vld [vmem:[%s4] sm:$0xff]
        %774 = vset.pattern.permute.xlu0 0
        %775 = vperm.xlu0 %774, %v772
        %v776 = vpop.permute.xlu0 %775
        %v778 = vadd.f32 %v771, %v776
        %v779 = vmax.f32 %v778, 0.0
        %v780 = vld [vmem:[%s5] sm:$0xff]
        %v781 = vld [vmem:[%s6] sm:$0xff]
        %783 = vset.pattern.permute.xlu0 0
        %784 = vperm.xlu0 %783, %v781
        %v785 = vpop.permute.xlu0 %784
        %v788 = vsel %vm290, %v780, 0
        %v790 = vsel %vm294, %v274, 0
        %792 = vmatprep.subr.mxu0 0.0
        %793 = vmatpush1.msra.mxu0 0.0
        %794 = vmatprep.subr.mxu0 0.0
        %795 = vmatpush1.msra.mxu0 0.0
        %796 = vmatprep.subr.mxu0 0.0
        %797 = vmatpush1.msra.mxu0 0.0
        %798 = vmatprep.subr.mxu0 0.0
        %799 = vmatpush1.msra.mxu0 0.0
        %800 = vmatprep.subr.mxu0 0.0
        %801 = vmatpush1.msra.mxu0 0.0
        %802 = vmatprep.subr.mxu0 0.0
        %803 = vmatpush1.msra.mxu0 0.0
        %804 = vmatprep.subr.mxu0 0.0
        %805 = vmatpush1.msra.mxu0 0.0
        %806 = vmatprep.subr.mxu0 0.0
        %807 = vmatpush1.msra.mxu0 0.0
        %808 = vmatprep.subr.mxu0 0.0
        %809 = vmatpush1.msra.mxu0 0.0
        %810 = vmatprep.subr.mxu0 0.0
        %811 = vmatpush1.msra.mxu0 0.0
        %812 = vmatprep.subr.mxu0 0.0
        %813 = vmatpush1.msra.mxu0 0.0
        %814 = vmatprep.subr.mxu0 0.0
        %815 = vmatpush1.msra.mxu0 0.0
        %816 = vmatprep.subr.mxu0 0.0
        %817 = vmatpush1.msra.mxu0 0.0
        %818 = vmatprep.subr.mxu0 0.0
        %819 = vmatpush1.msra.mxu0 0.0
        %820 = vmatprep.subr.mxu0 0.0
        %821 = vmatpush1.msra.mxu0 0.0
        %822 = vmatprep.subr.mxu0 0.0
        %823 = vmatpush1.msra.mxu0 %v790
        %824 = vmatprep.subr.mxu0 0.0
        %825 = vmatpush2.msra.mxu0 0.0
        %826 = vmatprep.subr.mxu0 0.0
        %827 = vmatpush2.msra.mxu0 0.0
        %828 = vmatprep.subr.mxu0 0.0
        %829 = vmatpush2.msra.mxu0 0.0
        %830 = vmatprep.subr.mxu0 0.0
        %831 = vmatpush2.msra.mxu0 0.0
        %832 = vmatprep.subr.mxu0 0.0
        %833 = vmatpush2.msra.mxu0 0.0
        %834 = vmatprep.subr.mxu0 0.0
        %835 = vmatpush2.msra.mxu0 0.0
        %836 = vmatprep.subr.mxu0 0.0
        %837 = vmatpush2.msra.mxu0 0.0
        %838 = vmatprep.subr.mxu0 0.0
        %839 = vmatpush2.msra.mxu0 0.0
        %840 = vmatprep.subr.mxu0 0.0
        %841 = vmatpush2.msra.mxu0 0.0
        %842 = vmatprep.subr.mxu0 0.0
        %843 = vmatpush2.msra.mxu0 0.0
        %844 = vmatprep.subr.mxu0 0.0
        %845 = vmatpush2.msra.mxu0 0.0
        %846 = vmatprep.subr.mxu0 0.0
        %847 = vmatpush2.msra.mxu0 0.0
        %848 = vmatprep.subr.mxu0 0.0
        %849 = vmatpush2.msra.mxu0 0.0
        %850 = vmatprep.subr.mxu0 0.0
        %851 = vmatpush2.msra.mxu0 0.0
        %852 = vmatprep.subr.mxu0 0.0
        %853 = vmatpush2.msra.mxu0 0.0
        %854 = vmatprep.subr.mxu0 0.0
        %855 = vmatpush2.msra.mxu0 0.0
        %856 = vmatprep.mubr.f32.mxu0 0.0
        %857 = vmatmul.mubr.f32.gmra.mxu0 %v788
        %v858 = vpop.f32.mrf.mxu0
        %v859 = vadd.f32 %v785, %v858
        %v860 = vpop.f32.mrf.mxu0
        %861 = vdwg.mxu0
        %v862 = vadd.f32 %v779, %v859
        %v863 = vmax.f32 %v862, 0.0
        %vm864 = vcmask 130048
        %865 = vst.msk [vmem:[%s269] sm:$0xff] %vm864, %v863
        %s866 = sand.u32 %s181, 1
        %s867 = scalar_lea.sflag [#allocation5], %s866
        %s868 = sand.u32 %s181, 1
        %s869 = smul.addr %s868, 8
        %s870 = scalar_lea.vmem [#allocation4], %s869
        // Predicated region
        $region49: #{tpu_custom_call.1} parent=47 // pred_check
          %p871 = pneg %p191
        $region50: #{tpu_custom_call.1} parent=47 // pred_check_branch
          %873 = sbr.rel (%p871) target = $region52
        $region51: #{tpu_custom_call.1} parent=47 // pred_region
          %s875 = ssub.s32 128, 128
          %876 = vsyncadd %s867, %s875
          %s877 = smul.addr %s21, 128
          %s878 = scalar_lea.hbm %s7, %s877
          %s880 = sshll.u32 %s870, 4
          %s881 = int_to_ptr.vmem [resolvable:$true] %s880
          %883 = dma.vmem_to_hbm [thread:$0]  %s881, 128, %s878, %s867
        $region52: #{tpu_custom_call.1} parent=47 // pred_fallthru
          _
      $region48: #{tpu_custom_call.1} parent=5 // pred_fallthru
        _
      %p884 = scmp.le.s32.totalorder 2, %s16
      // Predicated region
      $region53: #{tpu_custom_call.1} parent=5 // pred_check
        %p885 = pneg %p884
      $region54: #{tpu_custom_call.1} parent=5 // pred_check_branch
        %887 = sbr.rel (%p885) target = $region56
      $region55: #{tpu_custom_call.1} parent=5 // pred_region
        %s888 = ssub.s32 %s16, 2
        // Predicated region
        $region57: #{tpu_custom_call.1} parent=55 // pred_check
          %p889 = pneg %p197
        $region58: #{tpu_custom_call.1} parent=55 // pred_check_branch
          %891 = sbr.rel (%p889) target = $region60
        $region59: #{tpu_custom_call.1} parent=55 // pred_region
          %s892 = sand.u32 %s182, 1
          %s893 = scalar_lea.sflag [#allocation5], %s892
          %s894 = sand.u32 %s182, 1
          %s895 = smul.addr %s894, 8
          %s896 = scalar_lea.vmem [#allocation4], %s895
          %897 = dma.done %s893, 128
        $region60: #{tpu_custom_call.1} parent=55 // pred_fallthru
          _
      $region56: #{tpu_custom_call.1} parent=5 // pred_fallthru
        _
    $region6: #{tpu_custom_call.1} parent=1 // loop_footer
      %s20 = sadd.s32 1, %s16
    $region7: #{tpu_custom_call.1} parent=1 // loop_footer_branch
      %15 = sbr.rel target = $region3
    $region8: #{tpu_custom_call.1} parent=1 // loop_exit
      _
    %898 = vsyncpa [#allocation5], 1
    %s899 = scalar_lea.sflag [#allocation5], 1
    %900 = vsyncpa %s899, 1

</llo_original>
